<compile_context>
chip_gen: v6e
topology: v6e:2x2x1
jax: 0.10.0
libtpu: 0.0.40
codegen_flags: <defaults>
</compile_context>

<pallas_src>
import jax
import jax.numpy as jnp
import numpy as np
from jax.experimental import pallas as pl
from jax.experimental.pallas import tpu as pltpu


# ---------------------------------------------------------------------------
# Pallas kernel: one full bidirectional LSTM layer (both directions, all T steps)
# ---------------------------------------------------------------------------
def _bilstm_layer_kernel(gx_ref, whh_ref, out_ref):
    """Fused bidirectional LSTM recurrence.

    gx_ref : (T, Bp, 8H) f32  precomputed input projections (+bias), gate-interleaved:
             for gate k (i, f, g, o — PyTorch order):
               cols [2k*H:(2k+1)*H]     = gate k, FORWARD  dir, from x[t]
               cols [(2k+1)*H:(2k+2)*H] = gate k, BACKWARD dir, from x[T-1-t]
    whh_ref: (2H, 8H) bf16    block-structured recurrent weights matching gx layout.
    out_ref: (T, Bp, 2H) f32  out[t] = [h_fwd(t) | h_bwd(t)]
    """
    T, Bp, H2 = out_ref.shape
    H = H2 // 2

    w_hh = whh_ref[...]                                # loaded once

    h = jnp.zeros((Bp, H2), jnp.float32)               # [h_fwd | h_bwd]
    c = jnp.zeros((Bp, H2), jnp.float32)               # [c_fwd | c_bwd]

    # T is small & static -> fully unrolled loop (equivalent to
    # lax.fori_loop(..., unroll=True)); all indices below are static slices.
    for s in range(T):
        # single MXU matmul covers both directions (bf16 in, f32 accumulate)
        gates = gx_ref[s] + jnp.dot(h.astype(jnp.bfloat16), w_hh,
                                    preferred_element_type=jnp.float32)  # (Bp, 8H)
        i = jax.nn.sigmoid(gates[:, 0 * H2:1 * H2])
        f = jax.nn.sigmoid(gates[:, 1 * H2:2 * H2])
        g = jnp.tanh(gates[:, 2 * H2:3 * H2])
        o = jax.nn.sigmoid(gates[:, 3 * H2:4 * H2])
        c = f * c + i * g
        h = o * jnp.tanh(c)
        out_ref[s, :, 0:H] = h[:, 0:H]                 # forward h for time s
        out_ref[T - 1 - s, :, H:H2] = h[:, H:H2]       # backward h for time T-1-s


def bilstm_layer(gx_cat, w_hh_cat):
    """gx_cat: (T, Bp, 8H) f32; w_hh_cat: (2H, 8H) bf16 -> (T, Bp, 2H) f32."""
    T, Bp, G = gx_cat.shape
    H2 = G // 4
    return pl.pallas_call(
        _bilstm_layer_kernel,
        out_shape=jax.ShapeDtypeStruct((T, Bp, H2), jnp.float32),
        in_specs=[pl.BlockSpec(memory_space=pltpu.MemorySpace.VMEM),
                  pl.BlockSpec(memory_space=pltpu.MemorySpace.VMEM)],
        out_specs=pl.BlockSpec(memory_space=pltpu.MemorySpace.VMEM),
    )(gx_cat, w_hh_cat)


# ---------------------------------------------------------------------------
# Plain-JAX helpers (bulk matmuls / layout plumbing, fused by XLA under jit)
# ---------------------------------------------------------------------------
def _input_proj(x_tbf, w_ih, bias):
    # (T,Bp,F) @ (F,4H): one bulk, well-shaped matmul; bf16 MXU inputs, f32 accumulate.
    gx = jnp.einsum('tbf,fg->tbg', x_tbf.astype(jnp.bfloat16),
                    w_ih.astype(jnp.bfloat16),
                    preferred_element_type=jnp.float32)
    return gx + bias.astype(jnp.float32)


def _interleave_gates(gx_f, gx_b_rev, H):
    # (T,Bp,4H) x2 -> (T,Bp,8H) with per-gate [fwd | bwd] column blocks.
    T, Bp, _ = gx_f.shape
    a = gx_f.reshape(T, Bp, 4, 1, H)
    b = gx_b_rev.reshape(T, Bp, 4, 1, H)
    return jnp.concatenate([a, b], axis=3).reshape(T, Bp, 8 * H)


def _fuse_whh(w_hh_f, w_hh_b):
    # (H,4H) x2 -> (2H,8H) block-structured bf16 recurrent weight matching gx layout.
    H = w_hh_f.shape[0]
    wf = w_hh_f.reshape(H, 4, 1, H)
    wb = w_hh_b.reshape(H, 4, 1, H)
    z = jnp.zeros_like(wf)
    top = jnp.concatenate([wf, z], axis=2).reshape(H, 8 * H)   # rows <- h_fwd
    bot = jnp.concatenate([z, wb], axis=2).reshape(H, 8 * H)   # rows <- h_bwd
    return jnp.concatenate([top, bot], axis=0).astype(jnp.bfloat16)


# ---------------------------------------------------------------------------
# Parameter init (deterministic, shapes as in the PyTorch module)
# ---------------------------------------------------------------------------
def init_params(key, hidden_size, output_size, num_layers, embedding_length):
    params = {"layers": []}
    bound = 1.0 / np.sqrt(hidden_size)
    for layer in range(num_layers):
        in_size = embedding_length if layer == 0 else 2 * hidden_size
        layer_p = {}
        for d in ("fwd", "bwd"):
            key, k1, k2, k3, k4 = jax.random.split(key, 5)
            layer_p[d] = dict(
                # stored transposed vs PyTorch: (in, 4H) / (H, 4H); gate order i,f,g,o
                w_ih=jax.random.uniform(k1, (in_size, 4 * hidden_size),
                                        jnp.float32, -bound, bound),
                w_hh=jax.random.uniform(k2, (hidden_size, 4 * hidden_size),
                                        jnp.float32, -bound, bound),
                b_ih=jax.random.uniform(k3, (4 * hidden_size,),
                                        jnp.float32, -bound, bound),
                b_hh=jax.random.uniform(k4, (4 * hidden_size,),
                                        jnp.float32, -bound, bound),
            )
        params["layers"].append(layer_p)
    key, kw, kb = jax.random.split(key, 3)
    ob = 1.0 / np.sqrt(2 * hidden_size)
    params["out_w"] = jax.random.uniform(kw, (2 * hidden_size, output_size),
                                         jnp.float32, -ob, ob)
    params["out_b"] = jax.random.uniform(kb, (output_size,), jnp.float32, -ob, ob)
    return params


# ---------------------------------------------------------------------------
# Forward pass — mirrors BiLSTM_TextClassification_WithoutEmbed.forward (eval mode)
# ---------------------------------------------------------------------------
def forward(params, input_seq, seq_lens):
    B, T, E = input_seq.shape
    H = params["layers"][0]["fwd"]["w_hh"].shape[0]
    Bp = ((B + 7) // 8) * 8                                   # pad batch to full sublanes

    # input_seq.permute(1, 0, 2) -> time-major
    x = jnp.transpose(input_seq, (1, 0, 2)).astype(jnp.float32)        # (T, B, E)
    x = jnp.pad(x, ((0, 0), (0, Bp - B), (0, 0)))                      # (T, Bp, E)

    for layer_p in params["layers"]:
        fwd, bwd = layer_p["fwd"], layer_p["bwd"]
        gx_f = _input_proj(x, fwd["w_ih"], fwd["b_ih"] + fwd["b_hh"])  # (T, Bp, 4H)
        gx_b = _input_proj(x, bwd["w_ih"], bwd["b_ih"] + bwd["b_hh"])  # (T, Bp, 4H)
        gx_cat = _interleave_gates(gx_f, gx_b[::-1], H)                # (T, Bp, 8H)
        w_hh_cat = _fuse_whh(fwd["w_hh"], bwd["w_hh"])                 # (2H, 8H) bf16
        x = bilstm_layer(gx_cat, w_hh_cat)                             # (T, Bp, 2H)
        # TODO(synk): nn.LSTM inter-layer dropout and lstm_dropout_layer are identity
        # here (inference semantics); training-mode dropout RNG not replicated.

    output = jnp.transpose(x[:, :B, :], (1, 0, 2))                     # (B, T, 2H)
    # state = output[i, seq_len - 1, :] per batch element
    idx = (jnp.asarray(seq_lens, jnp.int32) - 1)[:, None, None]
    state = jnp.take_along_axis(output, idx, axis=1)[:, 0, :]          # (B, 2H)
    # Final tiny linear stays in plain JAX (below pallas_call fixed cost; XLA fuses it).
    return state @ params["out_w"] + params["out_b"]                   # (B, O)


# ---------------------------------------------------------------------------
# Pure-JAX reference (lax.scan), mirroring the bf16-matmul / f32-accumulate scheme
# ---------------------------------------------------------------------------
def _lstm_dir_ref(x_tbf, w_ih, w_hh, b, reverse):
    H = w_hh.shape[0]
    B = x_tbf.shape[1]
    gx = jnp.einsum('tbf,fg->tbg', x_tbf.astype(jnp.bfloat16),
                    w_ih.astype(jnp.bfloat16),
                    preferred_element_type=jnp.float32) + b
    w_hh_bf = w_hh.astype(jnp.bfloat16)

    def step(carry, g_x):
        h, c = carry
        gates = g_x + jnp.dot(h.astype(jnp.bfloat16), w_hh_bf,
                              preferred_element_type=jnp.float32)
        i = jax.nn.sigmoid(gates[:, 0:H])
        f = jax.nn.sigmoid(gates[:, H:2 * H])
        g = jnp.tanh(gates[:, 2 * H:3 * H])
        o = jax.nn.sigmoid(gates[:, 3 * H:4 * H])
        c = f * c + i * g
        h = o * jnp.tanh(c)
        return (h, c), h

    xs = gx[::-1] if reverse else gx
    init = (jnp.zeros((B, H), jnp.float32), jnp.zeros((B, H), jnp.float32))
    _, hs = jax.lax.scan(step, init, xs)
    return hs[::-1] if reverse else hs


def forward_ref(params, input_seq, seq_lens):
    x = jnp.transpose(input_seq, (1, 0, 2)).astype(jnp.float32)
    for layer_p in params["layers"]:
        fwd, bwd = layer_p["fwd"], layer_p["bwd"]
        out_f = _lstm_dir_ref(x, fwd["w_ih"], fwd["w_hh"],
                              fwd["b_ih"] + fwd["b_hh"], False)
        out_b = _lstm_dir_ref(x, bwd["w_ih"], bwd["w_hh"],
                              bwd["b_ih"] + bwd["b_hh"], True)
        x = jnp.concatenate([out_f, out_b], axis=-1)
    output = jnp.transpose(x, (1, 0, 2))
    idx = (jnp.asarray(seq_lens, jnp.int32) - 1)[:, None, None]
    state = jnp.take_along_axis(output, idx, axis=1)[:, 0, :]
    return state @ params["out_w"] + params["out_b"]


# ---------------------------------------------------------------------------
if __name__ == "__main__":
    B, T, E, H, L, O = 2, 8, 16, 32, 2, 4   # batch, seq, embed, hidden, layers, classes

    key = jax.random.PRNGKey(0)
    pkey, xkey = jax.random.split(key)
    params = init_params(pkey, hidden_size=H, output_size=O,
                         num_layers=L, embedding_length=E)

    input_seq = jax.random.normal(xkey, (B, T, E), jnp.float32)
    seq_lens = jnp.array([T, 5], dtype=jnp.int32)

    fwd_fn = jax.jit(forward)
    logits = jax.block_until_ready(fwd_fn(params, input_seq, seq_lens))

    ref = forward_ref(params, input_seq, seq_lens)
    assert logits.shape == (B, O)
    assert np.allclose(np.asarray(logits), np.asarray(ref), atol=5e-3, rtol=5e-3), \
        "Pallas output mismatch vs JAX reference"

    print("KERNEL_OK")
</pallas_src>

<mosaic_0001>
module attributes {stable_mosaic.version = 11 : i64} {
  func.func @_bilstm_layer_kernel(%arg0: memref<8x8x256xf32, #tpu.memory_space<vmem>>, %arg1: memref<64x256xbf16, #tpu.memory_space<vmem>>, %arg2: memref<8x8x64xf32, #tpu.memory_space<vmem>>) attributes {dimension_semantics = [], scalar_prefetch = 0 : i64, scratch_operands = 0 : i64, tpu.core_type = #tpu.core_type<tc>} {
    %c0 = arith.constant 0 : index
    %c0_0 = arith.constant 0 : index
    %0 = vector.load %arg1[%c0, %c0_0] : memref<64x256xbf16, #tpu.memory_space<vmem>>, vector<64x256xbf16>
    %cst = arith.constant 0.000000e+00 : f32
    %1 = vector.broadcast %cst : f32 to vector<8x64xf32>
    %cst_1 = arith.constant 0.000000e+00 : f32
    %2 = vector.broadcast %cst_1 : f32 to vector<8x64xf32>
    %c0_2 = arith.constant 0 : index
    %c0_3 = arith.constant 0 : index
    %c0_4 = arith.constant 0 : index
    %3 = vector.load %arg0[%c0_2, %c0_3, %c0_4] : memref<8x8x256xf32, #tpu.memory_space<vmem>>, vector<1x8x256xf32>
    %4 = vector.shape_cast %3 : vector<1x8x256xf32> to vector<8x256xf32>
    %5 = arith.truncf %1 : vector<8x64xf32> to vector<8x64xbf16>
    %cst_5 = arith.constant dense<0.000000e+00> : vector<8x256xf32>
    %6 = tpu.matmul %5, %0, %cst_5 {dimension_numbers = #tpu.dot_dimension_numbers<[1], [0], [0], [1], [0, 0, 1, 1], [], []>} : vector<8x64xbf16>, vector<64x256xbf16>, vector<8x256xf32> -> vector<8x256xf32>
    %7 = arith.addf %4, %6 : vector<8x256xf32>
    %8 = vector.extract_strided_slice %7 {offsets = [0, 0], sizes = [8, 64], strides = [1, 1]} : vector<8x256xf32> to vector<8x64xf32>
    %9 = arith.negf %8 : vector<8x64xf32>
    %10 = math.exp %9 : vector<8x64xf32>
    %cst_6 = arith.constant 1.000000e+00 : f32
    %11 = vector.broadcast %cst_6 : f32 to vector<8x64xf32>
    %12 = arith.addf %11, %10 : vector<8x64xf32>
    %13 = arith.divf %11, %12 : vector<8x64xf32>
    %14 = vector.extract_strided_slice %7 {offsets = [0, 64], sizes = [8, 64], strides = [1, 1]} : vector<8x256xf32> to vector<8x64xf32>
    %15 = arith.negf %14 : vector<8x64xf32>
    %16 = math.exp %15 : vector<8x64xf32>
    %cst_7 = arith.constant 1.000000e+00 : f32
    %17 = vector.broadcast %cst_7 : f32 to vector<8x64xf32>
    %18 = arith.addf %17, %16 : vector<8x64xf32>
    %19 = arith.divf %17, %18 : vector<8x64xf32>
    %20 = vector.extract_strided_slice %7 {offsets = [0, 128], sizes = [8, 64], strides = [1, 1]} : vector<8x256xf32> to vector<8x64xf32>
    %21 = math.tanh %20 : vector<8x64xf32>
    %22 = vector.extract_strided_slice %7 {offsets = [0, 192], sizes = [8, 64], strides = [1, 1]} : vector<8x256xf32> to vector<8x64xf32>
    %23 = arith.negf %22 : vector<8x64xf32>
    %24 = math.exp %23 : vector<8x64xf32>
    %cst_8 = arith.constant 1.000000e+00 : f32
    %25 = vector.broadcast %cst_8 : f32 to vector<8x64xf32>
    %26 = arith.addf %25, %24 : vector<8x64xf32>
    %27 = arith.divf %25, %26 : vector<8x64xf32>
    %28 = arith.mulf %19, %2 : vector<8x64xf32>
    %29 = arith.mulf %13, %21 : vector<8x64xf32>
    %30 = arith.addf %28, %29 : vector<8x64xf32>
    %31 = math.tanh %30 : vector<8x64xf32>
    %32 = arith.mulf %27, %31 : vector<8x64xf32>
    %33 = vector.extract_strided_slice %32 {offsets = [0, 0], sizes = [8, 32], strides = [1, 1]} : vector<8x64xf32> to vector<8x32xf32>
    %c0_9 = arith.constant 0 : index
    %c0_10 = arith.constant 0 : index
    %c0_11 = arith.constant 0 : index
    %34 = vector.load %arg2[%c0_9, %c0_10, %c0_11] : memref<8x8x64xf32, #tpu.memory_space<vmem>>, vector<1x8x32xf32>
    %35 = vector.shape_cast %34 : vector<1x8x32xf32> to vector<8x32xf32>
    %36 = vector.shape_cast %33 : vector<8x32xf32> to vector<1x8x32xf32>
    tpu.vector_store %arg2[%c0_9, %c0_10, %c0_11], %36 {strides = array<i32>} : memref<8x8x64xf32, #tpu.memory_space<vmem>>, vector<1x8x32xf32>,
    %37 = vector.extract_strided_slice %32 {offsets = [0, 32], sizes = [8, 32], strides = [1, 1]} : vector<8x64xf32> to vector<8x32xf32>
    %c7 = arith.constant 7 : index
    %c0_12 = arith.constant 0 : index
    %c32 = arith.constant 32 : index
    %38 = vector.load %arg2[%c7, %c0_12, %c32] : memref<8x8x64xf32, #tpu.memory_space<vmem>>, vector<1x8x32xf32>
    %39 = vector.shape_cast %38 : vector<1x8x32xf32> to vector<8x32xf32>
    %40 = vector.shape_cast %37 : vector<8x32xf32> to vector<1x8x32xf32>
    tpu.vector_store %arg2[%c7, %c0_12, %c32], %40 {strides = array<i32>} : memref<8x8x64xf32, #tpu.memory_space<vmem>>, vector<1x8x32xf32>,
    %c1 = arith.constant 1 : index
    %c0_13 = arith.constant 0 : index
    %c0_14 = arith.constant 0 : index
    %41 = vector.load %arg0[%c1, %c0_13, %c0_14] : memref<8x8x256xf32, #tpu.memory_space<vmem>>, vector<1x8x256xf32>
    %42 = vector.shape_cast %41 : vector<1x8x256xf32> to vector<8x256xf32>
    %43 = arith.truncf %32 : vector<8x64xf32> to vector<8x64xbf16>
    %cst_15 = arith.constant dense<0.000000e+00> : vector<8x256xf32>
    %44 = tpu.matmul %43, %0, %cst_15 {dimension_numbers = #tpu.dot_dimension_numbers<[1], [0], [0], [1], [0, 0, 1, 1], [], []>} : vector<8x64xbf16>, vector<64x256xbf16>, vector<8x256xf32> -> vector<8x256xf32>
    %45 = arith.addf %42, %44 : vector<8x256xf32>
    %46 = vector.extract_strided_slice %45 {offsets = [0, 0], sizes = [8, 64], strides = [1, 1]} : vector<8x256xf32> to vector<8x64xf32>
    %47 = arith.negf %46 : vector<8x64xf32>
    %48 = math.exp %47 : vector<8x64xf32>
    %cst_16 = arith.constant 1.000000e+00 : f32
    %49 = vector.broadcast %cst_16 : f32 to vector<8x64xf32>
    %50 = arith.addf %49, %48 : vector<8x64xf32>
    %51 = arith.divf %49, %50 : vector<8x64xf32>
    %52 = vector.extract_strided_slice %45 {offsets = [0, 64], sizes = [8, 64], strides = [1, 1]} : vector<8x256xf32> to vector<8x64xf32>
    %53 = arith.negf %52 : vector<8x64xf32>
    %54 = math.exp %53 : vector<8x64xf32>
    %cst_17 = arith.constant 1.000000e+00 : f32
    %55 = vector.broadcast %cst_17 : f32 to vector<8x64xf32>
    %56 = arith.addf %55, %54 : vector<8x64xf32>
    %57 = arith.divf %55, %56 : vector<8x64xf32>
    %58 = vector.extract_strided_slice %45 {offsets = [0, 128], sizes = [8, 64], strides = [1, 1]} : vector<8x256xf32> to vector<8x64xf32>
    %59 = math.tanh %58 : vector<8x64xf32>
    %60 = vector.extract_strided_slice %45 {offsets = [0, 192], sizes = [8, 64], strides = [1, 1]} : vector<8x256xf32> to vector<8x64xf32>
    %61 = arith.negf %60 : vector<8x64xf32>
    %62 = math.exp %61 : vector<8x64xf32>
    %cst_18 = arith.constant 1.000000e+00 : f32
    %63 = vector.broadcast %cst_18 : f32 to vector<8x64xf32>
    %64 = arith.addf %63, %62 : vector<8x64xf32>
    %65 = arith.divf %63, %64 : vector<8x64xf32>
    %66 = arith.mulf %57, %30 : vector<8x64xf32>
    %67 = arith.mulf %51, %59 : vector<8x64xf32>
    %68 = arith.addf %66, %67 : vector<8x64xf32>
    %69 = math.tanh %68 : vector<8x64xf32>
    %70 = arith.mulf %65, %69 : vector<8x64xf32>
    %71 = vector.extract_strided_slice %70 {offsets = [0, 0], sizes = [8, 32], strides = [1, 1]} : vector<8x64xf32> to vector<8x32xf32>
    %c1_19 = arith.constant 1 : index
    %c0_20 = arith.constant 0 : index
    %c0_21 = arith.constant 0 : index
    %72 = vector.load %arg2[%c1_19, %c0_20, %c0_21] : memref<8x8x64xf32, #tpu.memory_space<vmem>>, vector<1x8x32xf32>
    %73 = vector.shape_cast %72 : vector<1x8x32xf32> to vector<8x32xf32>
    %74 = vector.shape_cast %71 : vector<8x32xf32> to vector<1x8x32xf32>
    tpu.vector_store %arg2[%c1_19, %c0_20, %c0_21], %74 {strides = array<i32>} : memref<8x8x64xf32, #tpu.memory_space<vmem>>, vector<1x8x32xf32>,
    %75 = vector.extract_strided_slice %70 {offsets = [0, 32], sizes = [8, 32], strides = [1, 1]} : vector<8x64xf32> to vector<8x32xf32>
    %c6 = arith.constant 6 : index
    %c0_22 = arith.constant 0 : index
    %c32_23 = arith.constant 32 : index
    %76 = vector.load %arg2[%c6, %c0_22, %c32_23] : memref<8x8x64xf32, #tpu.memory_space<vmem>>, vector<1x8x32xf32>
    %77 = vector.shape_cast %76 : vector<1x8x32xf32> to vector<8x32xf32>
    %78 = vector.shape_cast %75 : vector<8x32xf32> to vector<1x8x32xf32>
    tpu.vector_store %arg2[%c6, %c0_22, %c32_23], %78 {strides = array<i32>} : memref<8x8x64xf32, #tpu.memory_space<vmem>>, vector<1x8x32xf32>,
    %c2 = arith.constant 2 : index
    %c0_24 = arith.constant 0 : index
    %c0_25 = arith.constant 0 : index
    %79 = vector.load %arg0[%c2, %c0_24, %c0_25] : memref<8x8x256xf32, #tpu.memory_space<vmem>>, vector<1x8x256xf32>
    %80 = vector.shape_cast %79 : vector<1x8x256xf32> to vector<8x256xf32>
    %81 = arith.truncf %70 : vector<8x64xf32> to vector<8x64xbf16>
    %cst_26 = arith.constant dense<0.000000e+00> : vector<8x256xf32>
    %82 = tpu.matmul %81, %0, %cst_26 {dimension_numbers = #tpu.dot_dimension_numbers<[1], [0], [0], [1], [0, 0, 1, 1], [], []>} : vector<8x64xbf16>, vector<64x256xbf16>, vector<8x256xf32> -> vector<8x256xf32>
    %83 = arith.addf %80, %82 : vector<8x256xf32>
    %84 = vector.extract_strided_slice %83 {offsets = [0, 0], sizes = [8, 64], strides = [1, 1]} : vector<8x256xf32> to vector<8x64xf32>
    %85 = arith.negf %84 : vector<8x64xf32>
    %86 = math.exp %85 : vector<8x64xf32>
    %cst_27 = arith.constant 1.000000e+00 : f32
    %87 = vector.broadcast %cst_27 : f32 to vector<8x64xf32>
    %88 = arith.addf %87, %86 : vector<8x64xf32>
    %89 = arith.divf %87, %88 : vector<8x64xf32>
    %90 = vector.extract_strided_slice %83 {offsets = [0, 64], sizes = [8, 64], strides = [1, 1]} : vector<8x256xf32> to vector<8x64xf32>
    %91 = arith.negf %90 : vector<8x64xf32>
    %92 = math.exp %91 : vector<8x64xf32>
    %cst_28 = arith.constant 1.000000e+00 : f32
    %93 = vector.broadcast %cst_28 : f32 to vector<8x64xf32>
    %94 = arith.addf %93, %92 : vector<8x64xf32>
    %95 = arith.divf %93, %94 : vector<8x64xf32>
    %96 = vector.extract_strided_slice %83 {offsets = [0, 128], sizes = [8, 64], strides = [1, 1]} : vector<8x256xf32> to vector<8x64xf32>
    %97 = math.tanh %96 : vector<8x64xf32>
    %98 = vector.extract_strided_slice %83 {offsets = [0, 192], sizes = [8, 64], strides = [1, 1]} : vector<8x256xf32> to vector<8x64xf32>
    %99 = arith.negf %98 : vector<8x64xf32>
    %100 = math.exp %99 : vector<8x64xf32>
    %cst_29 = arith.constant 1.000000e+00 : f32
    %101 = vector.broadcast %cst_29 : f32 to vector<8x64xf32>
    %102 = arith.addf %101, %100 : vector<8x64xf32>
    %103 = arith.divf %101, %102 : vector<8x64xf32>
    %104 = arith.mulf %95, %68 : vector<8x64xf32>
    %105 = arith.mulf %89, %97 : vector<8x64xf32>
    %106 = arith.addf %104, %105 : vector<8x64xf32>
    %107 = math.tanh %106 : vector<8x64xf32>
    %108 = arith.mulf %103, %107 : vector<8x64xf32>
    %109 = vector.extract_strided_slice %108 {offsets = [0, 0], sizes = [8, 32], strides = [1, 1]} : vector<8x64xf32> to vector<8x32xf32>
    %c2_30 = arith.constant 2 : index
    %c0_31 = arith.constant 0 : index
    %c0_32 = arith.constant 0 : index
    %110 = vector.load %arg2[%c2_30, %c0_31, %c0_32] : memref<8x8x64xf32, #tpu.memory_space<vmem>>, vector<1x8x32xf32>
    %111 = vector.shape_cast %110 : vector<1x8x32xf32> to vector<8x32xf32>
    %112 = vector.shape_cast %109 : vector<8x32xf32> to vector<1x8x32xf32>
    tpu.vector_store %arg2[%c2_30, %c0_31, %c0_32], %112 {strides = array<i32>} : memref<8x8x64xf32, #tpu.memory_space<vmem>>, vector<1x8x32xf32>,
    %113 = vector.extract_strided_slice %108 {offsets = [0, 32], sizes = [8, 32], strides = [1, 1]} : vector<8x64xf32> to vector<8x32xf32>
    %c5 = arith.constant 5 : index
    %c0_33 = arith.constant 0 : index
    %c32_34 = arith.constant 32 : index
    %114 = vector.load %arg2[%c5, %c0_33, %c32_34] : memref<8x8x64xf32, #tpu.memory_space<vmem>>, vector<1x8x32xf32>
    %115 = vector.shape_cast %114 : vector<1x8x32xf32> to vector<8x32xf32>
    %116 = vector.shape_cast %113 : vector<8x32xf32> to vector<1x8x32xf32>
    tpu.vector_store %arg2[%c5, %c0_33, %c32_34], %116 {strides = array<i32>} : memref<8x8x64xf32, #tpu.memory_space<vmem>>, vector<1x8x32xf32>,
    %c3 = arith.constant 3 : index
    %c0_35 = arith.constant 0 : index
    %c0_36 = arith.constant 0 : index
    %117 = vector.load %arg0[%c3, %c0_35, %c0_36] : memref<8x8x256xf32, #tpu.memory_space<vmem>>, vector<1x8x256xf32>
    %118 = vector.shape_cast %117 : vector<1x8x256xf32> to vector<8x256xf32>
    %119 = arith.truncf %108 : vector<8x64xf32> to vector<8x64xbf16>
    %cst_37 = arith.constant dense<0.000000e+00> : vector<8x256xf32>
    %120 = tpu.matmul %119, %0, %cst_37 {dimension_numbers = #tpu.dot_dimension_numbers<[1], [0], [0], [1], [0, 0, 1, 1], [], []>} : vector<8x64xbf16>, vector<64x256xbf16>, vector<8x256xf32> -> vector<8x256xf32>
    %121 = arith.addf %118, %120 : vector<8x256xf32>
    %122 = vector.extract_strided_slice %121 {offsets = [0, 0], sizes = [8, 64], strides = [1, 1]} : vector<8x256xf32> to vector<8x64xf32>
    %123 = arith.negf %122 : vector<8x64xf32>
    %124 = math.exp %123 : vector<8x64xf32>
    %cst_38 = arith.constant 1.000000e+00 : f32
    %125 = vector.broadcast %cst_38 : f32 to vector<8x64xf32>
    %126 = arith.addf %125, %124 : vector<8x64xf32>
    %127 = arith.divf %125, %126 : vector<8x64xf32>
    %128 = vector.extract_strided_slice %121 {offsets = [0, 64], sizes = [8, 64], strides = [1, 1]} : vector<8x256xf32> to vector<8x64xf32>
    %129 = arith.negf %128 : vector<8x64xf32>
    %130 = math.exp %129 : vector<8x64xf32>
    %cst_39 = arith.constant 1.000000e+00 : f32
    %131 = vector.broadcast %cst_39 : f32 to vector<8x64xf32>
    %132 = arith.addf %131, %130 : vector<8x64xf32>
    %133 = arith.divf %131, %132 : vector<8x64xf32>
    %134 = vector.extract_strided_slice %121 {offsets = [0, 128], sizes = [8, 64], strides = [1, 1]} : vector<8x256xf32> to vector<8x64xf32>
    %135 = math.tanh %134 : vector<8x64xf32>
    %136 = vector.extract_strided_slice %121 {offsets = [0, 192], sizes = [8, 64], strides = [1, 1]} : vector<8x256xf32> to vector<8x64xf32>
    %137 = arith.negf %136 : vector<8x64xf32>
    %138 = math.exp %137 : vector<8x64xf32>
    %cst_40 = arith.constant 1.000000e+00 : f32
    %139 = vector.broadcast %cst_40 : f32 to vector<8x64xf32>
    %140 = arith.addf %139, %138 : vector<8x64xf32>
    %141 = arith.divf %139, %140 : vector<8x64xf32>
    %142 = arith.mulf %133, %106 : vector<8x64xf32>
    %143 = arith.mulf %127, %135 : vector<8x64xf32>
    %144 = arith.addf %142, %143 : vector<8x64xf32>
    %145 = math.tanh %144 : vector<8x64xf32>
    %146 = arith.mulf %141, %145 : vector<8x64xf32>
    %147 = vector.extract_strided_slice %146 {offsets = [0, 0], sizes = [8, 32], strides = [1, 1]} : vector<8x64xf32> to vector<8x32xf32>
    %c3_41 = arith.constant 3 : index
    %c0_42 = arith.constant 0 : index
    %c0_43 = arith.constant 0 : index
    %148 = vector.load %arg2[%c3_41, %c0_42, %c0_43] : memref<8x8x64xf32, #tpu.memory_space<vmem>>, vector<1x8x32xf32>
    %149 = vector.shape_cast %148 : vector<1x8x32xf32> to vector<8x32xf32>
    %150 = vector.shape_cast %147 : vector<8x32xf32> to vector<1x8x32xf32>
    tpu.vector_store %arg2[%c3_41, %c0_42, %c0_43], %150 {strides = array<i32>} : memref<8x8x64xf32, #tpu.memory_space<vmem>>, vector<1x8x32xf32>,
    %151 = vector.extract_strided_slice %146 {offsets = [0, 32], sizes = [8, 32], strides = [1, 1]} : vector<8x64xf32> to vector<8x32xf32>
    %c4 = arith.constant 4 : index
    %c0_44 = arith.constant 0 : index
    %c32_45 = arith.constant 32 : index
    %152 = vector.load %arg2[%c4, %c0_44, %c32_45] : memref<8x8x64xf32, #tpu.memory_space<vmem>>, vector<1x8x32xf32>
    %153 = vector.shape_cast %152 : vector<1x8x32xf32> to vector<8x32xf32>
    %154 = vector.shape_cast %151 : vector<8x32xf32> to vector<1x8x32xf32>
    tpu.vector_store %arg2[%c4, %c0_44, %c32_45], %154 {strides = array<i32>} : memref<8x8x64xf32, #tpu.memory_space<vmem>>, vector<1x8x32xf32>,
    %c4_46 = arith.constant 4 : index
    %c0_47 = arith.constant 0 : index
    %c0_48 = arith.constant 0 : index
    %155 = vector.load %arg0[%c4_46, %c0_47, %c0_48] : memref<8x8x256xf32, #tpu.memory_space<vmem>>, vector<1x8x256xf32>
    %156 = vector.shape_cast %155 : vector<1x8x256xf32> to vector<8x256xf32>
    %157 = arith.truncf %146 : vector<8x64xf32> to vector<8x64xbf16>
    %cst_49 = arith.constant dense<0.000000e+00> : vector<8x256xf32>
    %158 = tpu.matmul %157, %0, %cst_49 {dimension_numbers = #tpu.dot_dimension_numbers<[1], [0], [0], [1], [0, 0, 1, 1], [], []>} : vector<8x64xbf16>, vector<64x256xbf16>, vector<8x256xf32> -> vector<8x256xf32>
    %159 = arith.addf %156, %158 : vector<8x256xf32>
    %160 = vector.extract_strided_slice %159 {offsets = [0, 0], sizes = [8, 64], strides = [1, 1]} : vector<8x256xf32> to vector<8x64xf32>
    %161 = arith.negf %160 : vector<8x64xf32>
    %162 = math.exp %161 : vector<8x64xf32>
    %cst_50 = arith.constant 1.000000e+00 : f32
    %163 = vector.broadcast %cst_50 : f32 to vector<8x64xf32>
    %164 = arith.addf %163, %162 : vector<8x64xf32>
    %165 = arith.divf %163, %164 : vector<8x64xf32>
    %166 = vector.extract_strided_slice %159 {offsets = [0, 64], sizes = [8, 64], strides = [1, 1]} : vector<8x256xf32> to vector<8x64xf32>
    %167 = arith.negf %166 : vector<8x64xf32>
    %168 = math.exp %167 : vector<8x64xf32>
    %cst_51 = arith.constant 1.000000e+00 : f32
    %169 = vector.broadcast %cst_51 : f32 to vector<8x64xf32>
    %170 = arith.addf %169, %168 : vector<8x64xf32>
    %171 = arith.divf %169, %170 : vector<8x64xf32>
    %172 = vector.extract_strided_slice %159 {offsets = [0, 128], sizes = [8, 64], strides = [1, 1]} : vector<8x256xf32> to vector<8x64xf32>
    %173 = math.tanh %172 : vector<8x64xf32>
    %174 = vector.extract_strided_slice %159 {offsets = [0, 192], sizes = [8, 64], strides = [1, 1]} : vector<8x256xf32> to vector<8x64xf32>
    %175 = arith.negf %174 : vector<8x64xf32>
    %176 = math.exp %175 : vector<8x64xf32>
    %cst_52 = arith.constant 1.000000e+00 : f32
    %177 = vector.broadcast %cst_52 : f32 to vector<8x64xf32>
    %178 = arith.addf %177, %176 : vector<8x64xf32>
    %179 = arith.divf %177, %178 : vector<8x64xf32>
    %180 = arith.mulf %171, %144 : vector<8x64xf32>
    %181 = arith.mulf %165, %173 : vector<8x64xf32>
    %182 = arith.addf %180, %181 : vector<8x64xf32>
    %183 = math.tanh %182 : vector<8x64xf32>
    %184 = arith.mulf %179, %183 : vector<8x64xf32>
    %185 = vector.extract_strided_slice %184 {offsets = [0, 0], sizes = [8, 32], strides = [1, 1]} : vector<8x64xf32> to vector<8x32xf32>
    %c4_53 = arith.constant 4 : index
    %c0_54 = arith.constant 0 : index
    %c0_55 = arith.constant 0 : index
    %186 = vector.load %arg2[%c4_53, %c0_54, %c0_55] : memref<8x8x64xf32, #tpu.memory_space<vmem>>, vector<1x8x32xf32>
    %187 = vector.shape_cast %186 : vector<1x8x32xf32> to vector<8x32xf32>
    %188 = vector.shape_cast %185 : vector<8x32xf32> to vector<1x8x32xf32>
    tpu.vector_store %arg2[%c4_53, %c0_54, %c0_55], %188 {strides = array<i32>} : memref<8x8x64xf32, #tpu.memory_space<vmem>>, vector<1x8x32xf32>,
    %189 = vector.extract_strided_slice %184 {offsets = [0, 32], sizes = [8, 32], strides = [1, 1]} : vector<8x64xf32> to vector<8x32xf32>
    %c3_56 = arith.constant 3 : index
    %c0_57 = arith.constant 0 : index
    %c32_58 = arith.constant 32 : index
    %190 = vector.load %arg2[%c3_56, %c0_57, %c32_58] : memref<8x8x64xf32, #tpu.memory_space<vmem>>, vector<1x8x32xf32>
    %191 = vector.shape_cast %190 : vector<1x8x32xf32> to vector<8x32xf32>
    %192 = vector.shape_cast %189 : vector<8x32xf32> to vector<1x8x32xf32>
    tpu.vector_store %arg2[%c3_56, %c0_57, %c32_58], %192 {strides = array<i32>} : memref<8x8x64xf32, #tpu.memory_space<vmem>>, vector<1x8x32xf32>,
    %c5_59 = arith.constant 5 : index
    %c0_60 = arith.constant 0 : index
    %c0_61 = arith.constant 0 : index
    %193 = vector.load %arg0[%c5_59, %c0_60, %c0_61] : memref<8x8x256xf32, #tpu.memory_space<vmem>>, vector<1x8x256xf32>
    %194 = vector.shape_cast %193 : vector<1x8x256xf32> to vector<8x256xf32>
    %195 = arith.truncf %184 : vector<8x64xf32> to vector<8x64xbf16>
    %cst_62 = arith.constant dense<0.000000e+00> : vector<8x256xf32>
    %196 = tpu.matmul %195, %0, %cst_62 {dimension_numbers = #tpu.dot_dimension_numbers<[1], [0], [0], [1], [0, 0, 1, 1], [], []>} : vector<8x64xbf16>, vector<64x256xbf16>, vector<8x256xf32> -> vector<8x256xf32>
    %197 = arith.addf %194, %196 : vector<8x256xf32>
    %198 = vector.extract_strided_slice %197 {offsets = [0, 0], sizes = [8, 64], strides = [1, 1]} : vector<8x256xf32> to vector<8x64xf32>
    %199 = arith.negf %198 : vector<8x64xf32>
    %200 = math.exp %199 : vector<8x64xf32>
    %cst_63 = arith.constant 1.000000e+00 : f32
    %201 = vector.broadcast %cst_63 : f32 to vector<8x64xf32>
    %202 = arith.addf %201, %200 : vector<8x64xf32>
    %203 = arith.divf %201, %202 : vector<8x64xf32>
    %204 = vector.extract_strided_slice %197 {offsets = [0, 64], sizes = [8, 64], strides = [1, 1]} : vector<8x256xf32> to vector<8x64xf32>
    %205 = arith.negf %204 : vector<8x64xf32>
    %206 = math.exp %205 : vector<8x64xf32>
    %cst_64 = arith.constant 1.000000e+00 : f32
    %207 = vector.broadcast %cst_64 : f32 to vector<8x64xf32>
    %208 = arith.addf %207, %206 : vector<8x64xf32>
    %209 = arith.divf %207, %208 : vector<8x64xf32>
    %210 = vector.extract_strided_slice %197 {offsets = [0, 128], sizes = [8, 64], strides = [1, 1]} : vector<8x256xf32> to vector<8x64xf32>
    %211 = math.tanh %210 : vector<8x64xf32>
    %212 = vector.extract_strided_slice %197 {offsets = [0, 192], sizes = [8, 64], strides = [1, 1]} : vector<8x256xf32> to vector<8x64xf32>
    %213 = arith.negf %212 : vector<8x64xf32>
    %214 = math.exp %213 : vector<8x64xf32>
    %cst_65 = arith.constant 1.000000e+00 : f32
    %215 = vector.broadcast %cst_65 : f32 to vector<8x64xf32>
    %216 = arith.addf %215, %214 : vector<8x64xf32>
    %217 = arith.divf %215, %216 : vector<8x64xf32>
    %218 = arith.mulf %209, %182 : vector<8x64xf32>
    %219 = arith.mulf %203, %211 : vector<8x64xf32>
    %220 = arith.addf %218, %219 : vector<8x64xf32>
    %221 = math.tanh %220 : vector<8x64xf32>
    %222 = arith.mulf %217, %221 : vector<8x64xf32>
    %223 = vector.extract_strided_slice %222 {offsets = [0, 0], sizes = [8, 32], strides = [1, 1]} : vector<8x64xf32> to vector<8x32xf32>
    %c5_66 = arith.constant 5 : index
    %c0_67 = arith.constant 0 : index
    %c0_68 = arith.constant 0 : index
    %224 = vector.load %arg2[%c5_66, %c0_67, %c0_68] : memref<8x8x64xf32, #tpu.memory_space<vmem>>, vector<1x8x32xf32>
    %225 = vector.shape_cast %224 : vector<1x8x32xf32> to vector<8x32xf32>
    %226 = vector.shape_cast %223 : vector<8x32xf32> to vector<1x8x32xf32>
    tpu.vector_store %arg2[%c5_66, %c0_67, %c0_68], %226 {strides = array<i32>} : memref<8x8x64xf32, #tpu.memory_space<vmem>>, vector<1x8x32xf32>,
    %227 = vector.extract_strided_slice %222 {offsets = [0, 32], sizes = [8, 32], strides = [1, 1]} : vector<8x64xf32> to vector<8x32xf32>
    %c2_69 = arith.constant 2 : index
    %c0_70 = arith.constant 0 : index
    %c32_71 = arith.constant 32 : index
    %228 = vector.load %arg2[%c2_69, %c0_70, %c32_71] : memref<8x8x64xf32, #tpu.memory_space<vmem>>, vector<1x8x32xf32>
    %229 = vector.shape_cast %228 : vector<1x8x32xf32> to vector<8x32xf32>
    %230 = vector.shape_cast %227 : vector<8x32xf32> to vector<1x8x32xf32>
    tpu.vector_store %arg2[%c2_69, %c0_70, %c32_71], %230 {strides = array<i32>} : memref<8x8x64xf32, #tpu.memory_space<vmem>>, vector<1x8x32xf32>,
    %c6_72 = arith.constant 6 : index
    %c0_73 = arith.constant 0 : index
    %c0_74 = arith.constant 0 : index
    %231 = vector.load %arg0[%c6_72, %c0_73, %c0_74] : memref<8x8x256xf32, #tpu.memory_space<vmem>>, vector<1x8x256xf32>
    %232 = vector.shape_cast %231 : vector<1x8x256xf32> to vector<8x256xf32>
    %233 = arith.truncf %222 : vector<8x64xf32> to vector<8x64xbf16>
    %cst_75 = arith.constant dense<0.000000e+00> : vector<8x256xf32>
    %234 = tpu.matmul %233, %0, %cst_75 {dimension_numbers = #tpu.dot_dimension_numbers<[1], [0], [0], [1], [0, 0, 1, 1], [], []>} : vector<8x64xbf16>, vector<64x256xbf16>, vector<8x256xf32> -> vector<8x256xf32>
    %235 = arith.addf %232, %234 : vector<8x256xf32>
    %236 = vector.extract_strided_slice %235 {offsets = [0, 0], sizes = [8, 64], strides = [1, 1]} : vector<8x256xf32> to vector<8x64xf32>
    %237 = arith.negf %236 : vector<8x64xf32>
    %238 = math.exp %237 : vector<8x64xf32>
    %cst_76 = arith.constant 1.000000e+00 : f32
    %239 = vector.broadcast %cst_76 : f32 to vector<8x64xf32>
    %240 = arith.addf %239, %238 : vector<8x64xf32>
    %241 = arith.divf %239, %240 : vector<8x64xf32>
    %242 = vector.extract_strided_slice %235 {offsets = [0, 64], sizes = [8, 64], strides = [1, 1]} : vector<8x256xf32> to vector<8x64xf32>
    %243 = arith.negf %242 : vector<8x64xf32>
    %244 = math.exp %243 : vector<8x64xf32>
    %cst_77 = arith.constant 1.000000e+00 : f32
    %245 = vector.broadcast %cst_77 : f32 to vector<8x64xf32>
    %246 = arith.addf %245, %244 : vector<8x64xf32>
    %247 = arith.divf %245, %246 : vector<8x64xf32>
    %248 = vector.extract_strided_slice %235 {offsets = [0, 128], sizes = [8, 64], strides = [1, 1]} : vector<8x256xf32> to vector<8x64xf32>
    %249 = math.tanh %248 : vector<8x64xf32>
    %250 = vector.extract_strided_slice %235 {offsets = [0, 192], sizes = [8, 64], strides = [1, 1]} : vector<8x256xf32> to vector<8x64xf32>
    %251 = arith.negf %250 : vector<8x64xf32>
    %252 = math.exp %251 : vector<8x64xf32>
    %cst_78 = arith.constant 1.000000e+00 : f32
    %253 = vector.broadcast %cst_78 : f32 to vector<8x64xf32>
    %254 = arith.addf %253, %252 : vector<8x64xf32>
    %255 = arith.divf %253, %254 : vector<8x64xf32>
    %256 = arith.mulf %247, %220 : vector<8x64xf32>
    %257 = arith.mulf %241, %249 : vector<8x64xf32>
    %258 = arith.addf %256, %257 : vector<8x64xf32>
    %259 = math.tanh %258 : vector<8x64xf32>
    %260 = arith.mulf %255, %259 : vector<8x64xf32>
    %261 = vector.extract_strided_slice %260 {offsets = [0, 0], sizes = [8, 32], strides = [1, 1]} : vector<8x64xf32> to vector<8x32xf32>
    %c6_79 = arith.constant 6 : index
    %c0_80 = arith.constant 0 : index
    %c0_81 = arith.constant 0 : index
    %262 = vector.load %arg2[%c6_79, %c0_80, %c0_81] : memref<8x8x64xf32, #tpu.memory_space<vmem>>, vector<1x8x32xf32>
    %263 = vector.shape_cast %262 : vector<1x8x32xf32> to vector<8x32xf32>
    %264 = vector.shape_cast %261 : vector<8x32xf32> to vector<1x8x32xf32>
    tpu.vector_store %arg2[%c6_79, %c0_80, %c0_81], %264 {strides = array<i32>} : memref<8x8x64xf32, #tpu.memory_space<vmem>>, vector<1x8x32xf32>,
    %265 = vector.extract_strided_slice %260 {offsets = [0, 32], sizes = [8, 32], strides = [1, 1]} : vector<8x64xf32> to vector<8x32xf32>
    %c1_82 = arith.constant 1 : index
    %c0_83 = arith.constant 0 : index
    %c32_84 = arith.constant 32 : index
    %266 = vector.load %arg2[%c1_82, %c0_83, %c32_84] : memref<8x8x64xf32, #tpu.memory_space<vmem>>, vector<1x8x32xf32>
    %267 = vector.shape_cast %266 : vector<1x8x32xf32> to vector<8x32xf32>
    %268 = vector.shape_cast %265 : vector<8x32xf32> to vector<1x8x32xf32>
    tpu.vector_store %arg2[%c1_82, %c0_83, %c32_84], %268 {strides = array<i32>} : memref<8x8x64xf32, #tpu.memory_space<vmem>>, vector<1x8x32xf32>,
    %c7_85 = arith.constant 7 : index
    %c0_86 = arith.constant 0 : index
    %c0_87 = arith.constant 0 : index
    %269 = vector.load %arg0[%c7_85, %c0_86, %c0_87] : memref<8x8x256xf32, #tpu.memory_space<vmem>>, vector<1x8x256xf32>
    %270 = vector.shape_cast %269 : vector<1x8x256xf32> to vector<8x256xf32>
    %271 = arith.truncf %260 : vector<8x64xf32> to vector<8x64xbf16>
    %cst_88 = arith.constant dense<0.000000e+00> : vector<8x256xf32>
    %272 = tpu.matmul %271, %0, %cst_88 {dimension_numbers = #tpu.dot_dimension_numbers<[1], [0], [0], [1], [0, 0, 1, 1], [], []>} : vector<8x64xbf16>, vector<64x256xbf16>, vector<8x256xf32> -> vector<8x256xf32>
    %273 = arith.addf %270, %272 : vector<8x256xf32>
    %274 = vector.extract_strided_slice %273 {offsets = [0, 0], sizes = [8, 64], strides = [1, 1]} : vector<8x256xf32> to vector<8x64xf32>
    %275 = arith.negf %274 : vector<8x64xf32>
    %276 = math.exp %275 : vector<8x64xf32>
    %cst_89 = arith.constant 1.000000e+00 : f32
    %277 = vector.broadcast %cst_89 : f32 to vector<8x64xf32>
    %278 = arith.addf %277, %276 : vector<8x64xf32>
    %279 = arith.divf %277, %278 : vector<8x64xf32>
    %280 = vector.extract_strided_slice %273 {offsets = [0, 64], sizes = [8, 64], strides = [1, 1]} : vector<8x256xf32> to vector<8x64xf32>
    %281 = arith.negf %280 : vector<8x64xf32>
    %282 = math.exp %281 : vector<8x64xf32>
    %cst_90 = arith.constant 1.000000e+00 : f32
    %283 = vector.broadcast %cst_90 : f32 to vector<8x64xf32>
    %284 = arith.addf %283, %282 : vector<8x64xf32>
    %285 = arith.divf %283, %284 : vector<8x64xf32>
    %286 = vector.extract_strided_slice %273 {offsets = [0, 128], sizes = [8, 64], strides = [1, 1]} : vector<8x256xf32> to vector<8x64xf32>
    %287 = math.tanh %286 : vector<8x64xf32>
    %288 = vector.extract_strided_slice %273 {offsets = [0, 192], sizes = [8, 64], strides = [1, 1]} : vector<8x256xf32> to vector<8x64xf32>
    %289 = arith.negf %288 : vector<8x64xf32>
    %290 = math.exp %289 : vector<8x64xf32>
    %cst_91 = arith.constant 1.000000e+00 : f32
    %291 = vector.broadcast %cst_91 : f32 to vector<8x64xf32>
    %292 = arith.addf %291, %290 : vector<8x64xf32>
    %293 = arith.divf %291, %292 : vector<8x64xf32>
    %294 = arith.mulf %285, %258 : vector<8x64xf32>
    %295 = arith.mulf %279, %287 : vector<8x64xf32>
    %296 = arith.addf %294, %295 : vector<8x64xf32>
    %297 = math.tanh %296 : vector<8x64xf32>
    %298 = arith.mulf %293, %297 : vector<8x64xf32>
    %299 = vector.extract_strided_slice %298 {offsets = [0, 0], sizes = [8, 32], strides = [1, 1]} : vector<8x64xf32> to vector<8x32xf32>
    %c7_92 = arith.constant 7 : index
    %c0_93 = arith.constant 0 : index
    %c0_94 = arith.constant 0 : index
    %300 = vector.load %arg2[%c7_92, %c0_93, %c0_94] : memref<8x8x64xf32, #tpu.memory_space<vmem>>, vector<1x8x32xf32>
    %301 = vector.shape_cast %300 : vector<1x8x32xf32> to vector<8x32xf32>
    %302 = vector.shape_cast %299 : vector<8x32xf32> to vector<1x8x32xf32>
    tpu.vector_store %arg2[%c7_92, %c0_93, %c0_94], %302 {strides = array<i32>} : memref<8x8x64xf32, #tpu.memory_space<vmem>>, vector<1x8x32xf32>,
    %303 = vector.extract_strided_slice %298 {offsets = [0, 32], sizes = [8, 32], strides = [1, 1]} : vector<8x64xf32> to vector<8x32xf32>
    %c0_95 = arith.constant 0 : index
    %c0_96 = arith.constant 0 : index
    %c32_97 = arith.constant 32 : index
    %304 = vector.load %arg2[%c0_95, %c0_96, %c32_97] : memref<8x8x64xf32, #tpu.memory_space<vmem>>, vector<1x8x32xf32>
    %305 = vector.shape_cast %304 : vector<1x8x32xf32> to vector<8x32xf32>
    %306 = vector.shape_cast %303 : vector<8x32xf32> to vector<1x8x32xf32>
    tpu.vector_store %arg2[%c0_95, %c0_96, %c32_97], %306 {strides = array<i32>} : memref<8x8x64xf32, #tpu.memory_space<vmem>>, vector<1x8x32xf32>,
    return
  }
}

</mosaic_0001>

<llo_original>
// kernel: forward.2
$region0: #{forward.2}
  #allocation0 [shape = 'u32[]', space=smem, size = 0x4, offset = 0x4, fixed_abs, tag = 'smem constant byte address 0x4 - core index']
  #allocation1 [shape = 'u32[144,128]{1,0:T(1,128)}', space=vmem, size = 0x12000, scoped, tag = 'internal scratch']
  %s0 = inlined_call_operand.vmem [shape: f32[8,8,256], index: 0, kind: input, shape index: {}]
  %s1 = inlined_call_operand.vmem [shape: bf16[64,256], index: 1, kind: input, shape index: {}]
  %s2 = inlined_call_operand.vmem [shape: f32[8,8,64], index: 2, kind: output, shape index: {}]
  %s3 = sld [smem:[#allocation0]]
  $region18: #{forward.2} parent=0
    _
  %s5 = ssub.s32 1, %s3
  %s6 = scalar_select 0, %s5, %s3
  // Predicated region
  $region2: #{forward.2} parent=0 // pred_check
    _
  $region3: #{forward.2} parent=0 // pred_check_branch
    %8 = sbr.rel (0) target = $region5
  $region4: #{forward.2} parent=0 // pred_region
    _
  $region5: #{forward.2} parent=0 // pred_fallthru
    _
  // Predicated region
  $region6: #{forward.2} parent=0 // pred_check
    _
  $region7: #{forward.2} parent=0 // pred_check_branch
    %10 = sbr.rel (0) target = $region9
  $region8: #{forward.2} parent=0 // pred_region
    _
  $region9: #{forward.2} parent=0 // pred_fallthru
    _
  %v12 = vld [vmem:[%s1] sm:$0xff]
  %v13 = vld [vmem:[%s1 + $0x8] sm:$0xff]
  %v14 = vld [vmem:[%s1 + $0x10] sm:$0xff]
  %v15 = vld [vmem:[%s1 + $0x18] sm:$0xff]
  %v16 = vld [vmem:[%s1 + $0x20] sm:$0xff]
  %v17 = vld [vmem:[%s1 + $0x28] sm:$0xff]
  %v18 = vld [vmem:[%s1 + $0x30] sm:$0xff]
  %v19 = vld [vmem:[%s1 + $0x38] sm:$0xff]
  %v20 = vld [vmem:[%s0] sm:$0xff]
  %v21 = vld [vmem:[%s0 + $0x8] sm:$0xff]
  %v30 = vunpack.c.l.b16 %v12
  %v31 = vunpack.c.h.b16 %v12
  %v32 = vunpack.c.l.b16 %v13
  %v33 = vunpack.c.h.b16 %v13
  %v34 = vunpack.c.l.b16 %v14
  %v35 = vunpack.c.h.b16 %v14
  %v36 = vunpack.c.l.b16 %v15
  %v37 = vunpack.c.h.b16 %v15
  %v38 = vunpack.c.l.b16 %v16
  %v39 = vunpack.c.h.b16 %v16
  %v40 = vunpack.c.l.b16 %v17
  %v41 = vunpack.c.h.b16 %v17
  %v42 = vunpack.c.l.b16 %v18
  %v43 = vunpack.c.h.b16 %v18
  %v44 = vunpack.c.l.b16 %v19
  %v45 = vunpack.c.h.b16 %v19
  %v46 = vpack.c.b16 %v32, %v30
  %v47 = vpack.c.b16 %v33, %v31
  %v48 = vpack.c.b16 %v36, %v34
  %v49 = vpack.c.b16 %v37, %v35
  %v50 = vpack.c.b16 %v40, %v38
  %v51 = vpack.c.b16 %v41, %v39
  %v52 = vpack.c.b16 %v44, %v42
  %v53 = vpack.c.b16 %v45, %v43
  %vm62 = vcmask 523264
  %v64 = vsel %vm62, 0, 0
  %66 = vmatprep.subr.bf16.mxu0 0
  %67 = vmatpush1.bf16.msra.mxu0 0
  %68 = vmatprep.subr.bf16.mxu0 0
  %69 = vmatpush1.bf16.msra.mxu0 0
  %70 = vmatprep.subr.bf16.mxu0 0
  %71 = vmatpush1.bf16.msra.mxu0 0
  %72 = vmatprep.subr.bf16.mxu0 0
  %73 = vmatpush1.bf16.msra.mxu0 0
  %74 = vmatprep.subr.bf16.mxu0 %v53
  %75 = vmatpush1.bf16.msra.mxu0 %v52
  %76 = vmatprep.subr.bf16.mxu0 %v51
  %77 = vmatpush1.bf16.msra.mxu0 %v50
  %78 = vmatprep.subr.bf16.mxu0 %v49
  %79 = vmatpush1.bf16.msra.mxu0 %v48
  %80 = vmatprep.subr.bf16.mxu0 %v47
  %81 = vmatpush1.bf16.msra.mxu0 %v46
  %82 = vmatprep.subr.bf16.mxu0 0
  %83 = vmatpush2.bf16.msra.mxu0 0
  %84 = vmatprep.subr.bf16.mxu0 0
  %85 = vmatpush2.bf16.msra.mxu0 0
  %86 = vmatprep.subr.bf16.mxu0 0
  %87 = vmatpush2.bf16.msra.mxu0 0
  %88 = vmatprep.subr.bf16.mxu0 0
  %89 = vmatpush2.bf16.msra.mxu0 0
  %90 = vmatprep.subr.bf16.mxu0 0
  %91 = vmatpush2.bf16.msra.mxu0 0
  %92 = vmatprep.subr.bf16.mxu0 0
  %93 = vmatpush2.bf16.msra.mxu0 0
  %94 = vmatprep.subr.bf16.mxu0 0
  %95 = vmatpush2.bf16.msra.mxu0 0
  %96 = vmatprep.subr.bf16.mxu0 0
  %97 = vmatpush2.bf16.msra.mxu0 0
  %98 = vmatprep.mubr.bf16.mxu0 0
  %99 = vmatmul.mubr.bf16.gmra.mxu0 %v64
  %v100 = vpop.f32.mrf.mxu0
  %v101 = vadd.f32 0.0, %v100
  %v102 = vpop.f32.mrf.mxu0
  %v103 = vadd.f32 0.0, %v102
  %v104 = vpop.f32.mrf.mxu0
  %v105 = vpop.f32.mrf.mxu0
  %106 = vdwg.mxu0
  %v107 = vadd.f32 %v20, %v101
  %v108 = vadd.f32 %v21, %v103
  %v109 = vxor.u32 %v107, 2147483648
  %v110 = vmul.f32 %v109, 1.442695
  %v111 = vpow.pop %v110
  %v112 = vadd.f32 %v111, 1.0
  %v113 = vrcp.pop %v112
  %v114 = vmul.f32 1.0, %v113
  %v115 = vtanh.pop %v108
  %v116 = vxor.u32 %v108, 2147483648
  %v117 = vmul.f32 %v116, 1.442695
  %v118 = vpow.pop %v117
  %v119 = vadd.f32 %v118, 1.0
  %v120 = vrcp.pop %v119
  %v121 = vmul.f32 1.0, %v120
  %v122 = vmul.f32 %v114, 0.0
  %v123 = vmul.f32 %v114, %v115
  %125 = vrot.lane.b32.xlu0 %v123, 64
  %v126 = vpop.permute.xlu0 %125
  %v128 = vadd.f32 %v122, %v126
  %v129 = vtanh.pop %v128
  %v130 = vmul.f32 %v121, %v129
  %132 = vrot.lane.b32.xlu0 %v130, 64
  %v133 = vpop.permute.xlu0 %132
  %vm135 = vcmask 261120
  %136 = vst.msk [vmem:[%s2] sm:$0xff] %vm135, %v133
  %s137 = scalar_lea.vmem %s2, 56
  %vm138 = vcmask 523520
  %139 = vst.msk [vmem:[%s137] sm:$0xff] %vm138, %v133
  %s140 = scalar_lea.vmem %s0, 16
  %v141 = vld [vmem:[%s140] sm:$0xff]
  %v142 = vld [vmem:[%s140 + $0x8] sm:$0xff]
  %v143 = vpack.c.bf16 %v130, %v130
  %145 = vrot.lane.b32.xlu0 %v143, 64
  %v146 = vpop.permute.xlu0 %145
  %v148 = vsel %vm62, %v146, 0
  %150 = vmatprep.subr.bf16.mxu0 0
  %151 = vmatpush1.bf16.msra.mxu0 0
  %152 = vmatprep.subr.bf16.mxu0 0
  %153 = vmatpush1.bf16.msra.mxu0 0
  %154 = vmatprep.subr.bf16.mxu0 0
  %155 = vmatpush1.bf16.msra.mxu0 0
  %156 = vmatprep.subr.bf16.mxu0 0
  %157 = vmatpush1.bf16.msra.mxu0 0
  %158 = vmatprep.subr.bf16.mxu0 %v53
  %159 = vmatpush1.bf16.msra.mxu0 %v52
  %160 = vmatprep.subr.bf16.mxu0 %v51
  %161 = vmatpush1.bf16.msra.mxu0 %v50
  %162 = vmatprep.subr.bf16.mxu0 %v49
  %163 = vmatpush1.bf16.msra.mxu0 %v48
  %164 = vmatprep.subr.bf16.mxu0 %v47
  %165 = vmatpush1.bf16.msra.mxu0 %v46
  %166 = vmatprep.subr.bf16.mxu0 0
  %167 = vmatpush2.bf16.msra.mxu0 0
  %168 = vmatprep.subr.bf16.mxu0 0
  %169 = vmatpush2.bf16.msra.mxu0 0
  %170 = vmatprep.subr.bf16.mxu0 0
  %171 = vmatpush2.bf16.msra.mxu0 0
  %172 = vmatprep.subr.bf16.mxu0 0
  %173 = vmatpush2.bf16.msra.mxu0 0
  %174 = vmatprep.subr.bf16.mxu0 0
  %175 = vmatpush2.bf16.msra.mxu0 0
  %176 = vmatprep.subr.bf16.mxu0 0
  %177 = vmatpush2.bf16.msra.mxu0 0
  %178 = vmatprep.subr.bf16.mxu0 0
  %179 = vmatpush2.bf16.msra.mxu0 0
  %180 = vmatprep.subr.bf16.mxu0 0
  %181 = vmatpush2.bf16.msra.mxu0 0
  %182 = vmatprep.mubr.bf16.mxu0 0
  %183 = vmatmul.mubr.bf16.gmra.mxu0 %v148
  %v184 = vpop.f32.mrf.mxu0
  %v185 = vadd.f32 0.0, %v184
  %v186 = vpop.f32.mrf.mxu0
  %v187 = vadd.f32 0.0, %v186
  %v188 = vpop.f32.mrf.mxu0
  %v189 = vpop.f32.mrf.mxu0
  %190 = vdwg.mxu0
  %v191 = vadd.f32 %v141, %v185
  %v192 = vadd.f32 %v142, %v187
  %v193 = vxor.u32 %v191, 2147483648
  %v194 = vmul.f32 %v193, 1.442695
  %v195 = vpow.pop %v194
  %v196 = vadd.f32 %v195, 1.0
  %v197 = vrcp.pop %v196
  %v198 = vmul.f32 1.0, %v197
  %v199 = vtanh.pop %v192
  %v200 = vxor.u32 %v192, 2147483648
  %v201 = vmul.f32 %v200, 1.442695
  %v202 = vpow.pop %v201
  %v203 = vadd.f32 %v202, 1.0
  %v204 = vrcp.pop %v203
  %v205 = vmul.f32 1.0, %v204
  %v206 = vmul.f32 %v198, %v128
  %v207 = vmul.f32 %v198, %v199
  %209 = vrot.lane.b32.xlu0 %v207, 64
  %v210 = vpop.permute.xlu0 %209
  %v212 = vadd.f32 %v206, %v210
  %v213 = vtanh.pop %v212
  %v214 = vmul.f32 %v205, %v213
  %216 = vrot.lane.b32.xlu0 %v214, 64
  %v217 = vpop.permute.xlu0 %216
  %s219 = scalar_lea.vmem %s2, 8
  %220 = vst.msk [vmem:[%s219] sm:$0xff] %vm135, %v217
  %s221 = scalar_lea.vmem %s2, 48
  %222 = vst.msk [vmem:[%s221] sm:$0xff] %vm138, %v217
  %s223 = scalar_lea.vmem %s0, 32
  %v224 = vld [vmem:[%s223] sm:$0xff]
  %v225 = vld [vmem:[%s223 + $0x8] sm:$0xff]
  %v226 = vpack.c.bf16 %v214, %v214
  %228 = vrot.lane.b32.xlu0 %v226, 64
  %v229 = vpop.permute.xlu0 %228
  %v231 = vsel %vm62, %v229, 0
  %233 = vmatprep.subr.bf16.mxu0 0
  %234 = vmatpush1.bf16.msra.mxu0 0
  %235 = vmatprep.subr.bf16.mxu0 0
  %236 = vmatpush1.bf16.msra.mxu0 0
  %237 = vmatprep.subr.bf16.mxu0 0
  %238 = vmatpush1.bf16.msra.mxu0 0
  %239 = vmatprep.subr.bf16.mxu0 0
  %240 = vmatpush1.bf16.msra.mxu0 0
  %241 = vmatprep.subr.bf16.mxu0 %v53
  %242 = vmatpush1.bf16.msra.mxu0 %v52
  %243 = vmatprep.subr.bf16.mxu0 %v51
  %244 = vmatpush1.bf16.msra.mxu0 %v50
  %245 = vmatprep.subr.bf16.mxu0 %v49
  %246 = vmatpush1.bf16.msra.mxu0 %v48
  %247 = vmatprep.subr.bf16.mxu0 %v47
  %248 = vmatpush1.bf16.msra.mxu0 %v46
  %249 = vmatprep.subr.bf16.mxu0 0
  %250 = vmatpush2.bf16.msra.mxu0 0
  %251 = vmatprep.subr.bf16.mxu0 0
  %252 = vmatpush2.bf16.msra.mxu0 0
  %253 = vmatprep.subr.bf16.mxu0 0
  %254 = vmatpush2.bf16.msra.mxu0 0
  %255 = vmatprep.subr.bf16.mxu0 0
  %256 = vmatpush2.bf16.msra.mxu0 0
  %257 = vmatprep.subr.bf16.mxu0 0
  %258 = vmatpush2.bf16.msra.mxu0 0
  %259 = vmatprep.subr.bf16.mxu0 0
  %260 = vmatpush2.bf16.msra.mxu0 0
  %261 = vmatprep.subr.bf16.mxu0 0
  %262 = vmatpush2.bf16.msra.mxu0 0
  %263 = vmatprep.subr.bf16.mxu0 0
  %264 = vmatpush2.bf16.msra.mxu0 0
  %265 = vmatprep.mubr.bf16.mxu0 0
  %266 = vmatmul.mubr.bf16.gmra.mxu0 %v231
  %v267 = vpop.f32.mrf.mxu0
  %v268 = vadd.f32 0.0, %v267
  %v269 = vpop.f32.mrf.mxu0
  %v270 = vadd.f32 0.0, %v269
  %v271 = vpop.f32.mrf.mxu0
  %v272 = vpop.f32.mrf.mxu0
  %273 = vdwg.mxu0
  %v274 = vadd.f32 %v224, %v268
  %v275 = vadd.f32 %v225, %v270
  %v276 = vxor.u32 %v274, 2147483648
  %v277 = vmul.f32 %v276, 1.442695
  %v278 = vpow.pop %v277
  %v279 = vadd.f32 %v278, 1.0
  %v280 = vrcp.pop %v279
  %v281 = vmul.f32 1.0, %v280
  %v282 = vtanh.pop %v275
  %v283 = vxor.u32 %v275, 2147483648
  %v284 = vmul.f32 %v283, 1.442695
  %v285 = vpow.pop %v284
  %v286 = vadd.f32 %v285, 1.0
  %v287 = vrcp.pop %v286
  %v288 = vmul.f32 1.0, %v287
  %v289 = vmul.f32 %v281, %v212
  %v290 = vmul.f32 %v281, %v282
  %292 = vrot.lane.b32.xlu0 %v290, 64
  %v293 = vpop.permute.xlu0 %292
  %v295 = vadd.f32 %v289, %v293
  %v296 = vtanh.pop %v295
  %v297 = vmul.f32 %v288, %v296
  %299 = vrot.lane.b32.xlu0 %v297, 64
  %v300 = vpop.permute.xlu0 %299
  %s302 = scalar_lea.vmem %s2, 16
  %303 = vst.msk [vmem:[%s302] sm:$0xff] %vm135, %v300
  %s304 = scalar_lea.vmem %s2, 40
  %305 = vst.msk [vmem:[%s304] sm:$0xff] %vm138, %v300
  %s306 = scalar_lea.vmem %s0, 48
  %v307 = vld [vmem:[%s306] sm:$0xff]
  %v308 = vld [vmem:[%s306 + $0x8] sm:$0xff]
  %v309 = vpack.c.bf16 %v297, %v297
  %311 = vrot.lane.b32.xlu0 %v309, 64
  %v312 = vpop.permute.xlu0 %311
  %v314 = vsel %vm62, %v312, 0
  %316 = vmatprep.subr.bf16.mxu0 0
  %317 = vmatpush1.bf16.msra.mxu0 0
  %318 = vmatprep.subr.bf16.mxu0 0
  %319 = vmatpush1.bf16.msra.mxu0 0
  %320 = vmatprep.subr.bf16.mxu0 0
  %321 = vmatpush1.bf16.msra.mxu0 0
  %322 = vmatprep.subr.bf16.mxu0 0
  %323 = vmatpush1.bf16.msra.mxu0 0
  %324 = vmatprep.subr.bf16.mxu0 %v53
  %325 = vmatpush1.bf16.msra.mxu0 %v52
  %326 = vmatprep.subr.bf16.mxu0 %v51
  %327 = vmatpush1.bf16.msra.mxu0 %v50
  %328 = vmatprep.subr.bf16.mxu0 %v49
  %329 = vmatpush1.bf16.msra.mxu0 %v48
  %330 = vmatprep.subr.bf16.mxu0 %v47
  %331 = vmatpush1.bf16.msra.mxu0 %v46
  %332 = vmatprep.subr.bf16.mxu0 0
  %333 = vmatpush2.bf16.msra.mxu0 0
  %334 = vmatprep.subr.bf16.mxu0 0
  %335 = vmatpush2.bf16.msra.mxu0 0
  %336 = vmatprep.subr.bf16.mxu0 0
  %337 = vmatpush2.bf16.msra.mxu0 0
  %338 = vmatprep.subr.bf16.mxu0 0
  %339 = vmatpush2.bf16.msra.mxu0 0
  %340 = vmatprep.subr.bf16.mxu0 0
  %341 = vmatpush2.bf16.msra.mxu0 0
  %342 = vmatprep.subr.bf16.mxu0 0
  %343 = vmatpush2.bf16.msra.mxu0 0
  %344 = vmatprep.subr.bf16.mxu0 0
  %345 = vmatpush2.bf16.msra.mxu0 0
  %346 = vmatprep.subr.bf16.mxu0 0
  %347 = vmatpush2.bf16.msra.mxu0 0
  %348 = vmatprep.mubr.bf16.mxu0 0
  %349 = vmatmul.mubr.bf16.gmra.mxu0 %v314
  %v350 = vpop.f32.mrf.mxu0
  %v351 = vadd.f32 0.0, %v350
  %v352 = vpop.f32.mrf.mxu0
  %v353 = vadd.f32 0.0, %v352
  %v354 = vpop.f32.mrf.mxu0
  %v355 = vpop.f32.mrf.mxu0
  %356 = vdwg.mxu0
  %v357 = vadd.f32 %v307, %v351
  %v358 = vadd.f32 %v308, %v353
  %v359 = vxor.u32 %v357, 2147483648
  %v360 = vmul.f32 %v359, 1.442695
  %v361 = vpow.pop %v360
  %v362 = vadd.f32 %v361, 1.0
  %v363 = vrcp.pop %v362
  %v364 = vmul.f32 1.0, %v363
  %v365 = vtanh.pop %v358
  %v366 = vxor.u32 %v358, 2147483648
  %v367 = vmul.f32 %v366, 1.442695
  %v368 = vpow.pop %v367
  %v369 = vadd.f32 %v368, 1.0
  %v370 = vrcp.pop %v369
  %v371 = vmul.f32 1.0, %v370
  %v372 = vmul.f32 %v364, %v295
  %v373 = vmul.f32 %v364, %v365
  %375 = vrot.lane.b32.xlu0 %v373, 64
  %v376 = vpop.permute.xlu0 %375
  %v378 = vadd.f32 %v372, %v376
  %v379 = vtanh.pop %v378
  %v380 = vmul.f32 %v371, %v379
  %382 = vrot.lane.b32.xlu0 %v380, 64
  %v383 = vpop.permute.xlu0 %382
  %s385 = scalar_lea.vmem %s2, 24
  %386 = vst.msk [vmem:[%s385] sm:$0xff] %vm135, %v383
  %s387 = scalar_lea.vmem %s2, 32
  %388 = vst.msk [vmem:[%s387] sm:$0xff] %vm138, %v383
  %s389 = scalar_lea.vmem %s0, 64
  %v390 = vld [vmem:[%s389] sm:$0xff]
  %v391 = vld [vmem:[%s389 + $0x8] sm:$0xff]
  %v392 = vpack.c.bf16 %v380, %v380
  %394 = vrot.lane.b32.xlu0 %v392, 64
  %v395 = vpop.permute.xlu0 %394
  %v397 = vsel %vm62, %v395, 0
  %399 = vmatprep.subr.bf16.mxu0 0
  %400 = vmatpush1.bf16.msra.mxu0 0
  %401 = vmatprep.subr.bf16.mxu0 0
  %402 = vmatpush1.bf16.msra.mxu0 0
  %403 = vmatprep.subr.bf16.mxu0 0
  %404 = vmatpush1.bf16.msra.mxu0 0
  %405 = vmatprep.subr.bf16.mxu0 0
  %406 = vmatpush1.bf16.msra.mxu0 0
  %407 = vmatprep.subr.bf16.mxu0 %v53
  %408 = vmatpush1.bf16.msra.mxu0 %v52
  %409 = vmatprep.subr.bf16.mxu0 %v51
  %410 = vmatpush1.bf16.msra.mxu0 %v50
  %411 = vmatprep.subr.bf16.mxu0 %v49
  %412 = vmatpush1.bf16.msra.mxu0 %v48
  %413 = vmatprep.subr.bf16.mxu0 %v47
  %414 = vmatpush1.bf16.msra.mxu0 %v46
  %415 = vmatprep.subr.bf16.mxu0 0
  %416 = vmatpush2.bf16.msra.mxu0 0
  %417 = vmatprep.subr.bf16.mxu0 0
  %418 = vmatpush2.bf16.msra.mxu0 0
  %419 = vmatprep.subr.bf16.mxu0 0
  %420 = vmatpush2.bf16.msra.mxu0 0
  %421 = vmatprep.subr.bf16.mxu0 0
  %422 = vmatpush2.bf16.msra.mxu0 0
  %423 = vmatprep.subr.bf16.mxu0 0
  %424 = vmatpush2.bf16.msra.mxu0 0
  %425 = vmatprep.subr.bf16.mxu0 0
  %426 = vmatpush2.bf16.msra.mxu0 0
  %427 = vmatprep.subr.bf16.mxu0 0
  %428 = vmatpush2.bf16.msra.mxu0 0
  %429 = vmatprep.subr.bf16.mxu0 0
  %430 = vmatpush2.bf16.msra.mxu0 0
  %431 = vmatprep.mubr.bf16.mxu0 0
  %432 = vmatmul.mubr.bf16.gmra.mxu0 %v397
  %v433 = vpop.f32.mrf.mxu0
  %v434 = vadd.f32 0.0, %v433
  %v435 = vpop.f32.mrf.mxu0
  %v436 = vadd.f32 0.0, %v435
  %v437 = vpop.f32.mrf.mxu0
  %v438 = vpop.f32.mrf.mxu0
  %439 = vdwg.mxu0
  %v440 = vadd.f32 %v390, %v434
  %v441 = vadd.f32 %v391, %v436
  %v442 = vxor.u32 %v440, 2147483648
  %v443 = vmul.f32 %v442, 1.442695
  %v444 = vpow.pop %v443
  %v445 = vadd.f32 %v444, 1.0
  %v446 = vrcp.pop %v445
  %v447 = vmul.f32 1.0, %v446
  %v448 = vtanh.pop %v441
  %v449 = vxor.u32 %v441, 2147483648
  %v450 = vmul.f32 %v449, 1.442695
  %v451 = vpow.pop %v450
  %v452 = vadd.f32 %v451, 1.0
  %v453 = vrcp.pop %v452
  %v454 = vmul.f32 1.0, %v453
  %v455 = vmul.f32 %v447, %v378
  %v456 = vmul.f32 %v447, %v448
  %458 = vrot.lane.b32.xlu0 %v456, 64
  %v459 = vpop.permute.xlu0 %458
  %v461 = vadd.f32 %v455, %v459
  %v462 = vtanh.pop %v461
  %v463 = vmul.f32 %v454, %v462
  %465 = vrot.lane.b32.xlu0 %v463, 64
  %v466 = vpop.permute.xlu0 %465
  %468 = vst.msk [vmem:[%s387] sm:$0xff] %vm135, %v466
  %469 = vst.msk [vmem:[%s385] sm:$0xff] %vm138, %v466
  %s470 = scalar_lea.vmem %s0, 80
  %v471 = vld [vmem:[%s470] sm:$0xff]
  %v472 = vld [vmem:[%s470 + $0x8] sm:$0xff]
  %v473 = vpack.c.bf16 %v463, %v463
  %475 = vrot.lane.b32.xlu0 %v473, 64
  %v476 = vpop.permute.xlu0 %475
  %v478 = vsel %vm62, %v476, 0
  %480 = vmatprep.subr.bf16.mxu0 0
  %481 = vmatpush1.bf16.msra.mxu0 0
  %482 = vmatprep.subr.bf16.mxu0 0
  %483 = vmatpush1.bf16.msra.mxu0 0
  %484 = vmatprep.subr.bf16.mxu0 0
  %485 = vmatpush1.bf16.msra.mxu0 0
  %486 = vmatprep.subr.bf16.mxu0 0
  %487 = vmatpush1.bf16.msra.mxu0 0
  %488 = vmatprep.subr.bf16.mxu0 %v53
  %489 = vmatpush1.bf16.msra.mxu0 %v52
  %490 = vmatprep.subr.bf16.mxu0 %v51
  %491 = vmatpush1.bf16.msra.mxu0 %v50
  %492 = vmatprep.subr.bf16.mxu0 %v49
  %493 = vmatpush1.bf16.msra.mxu0 %v48
  %494 = vmatprep.subr.bf16.mxu0 %v47
  %495 = vmatpush1.bf16.msra.mxu0 %v46
  %496 = vmatprep.subr.bf16.mxu0 0
  %497 = vmatpush2.bf16.msra.mxu0 0
  %498 = vmatprep.subr.bf16.mxu0 0
  %499 = vmatpush2.bf16.msra.mxu0 0
  %500 = vmatprep.subr.bf16.mxu0 0
  %501 = vmatpush2.bf16.msra.mxu0 0
  %502 = vmatprep.subr.bf16.mxu0 0
  %503 = vmatpush2.bf16.msra.mxu0 0
  %504 = vmatprep.subr.bf16.mxu0 0
  %505 = vmatpush2.bf16.msra.mxu0 0
  %506 = vmatprep.subr.bf16.mxu0 0
  %507 = vmatpush2.bf16.msra.mxu0 0
  %508 = vmatprep.subr.bf16.mxu0 0
  %509 = vmatpush2.bf16.msra.mxu0 0
  %510 = vmatprep.subr.bf16.mxu0 0
  %511 = vmatpush2.bf16.msra.mxu0 0
  %512 = vmatprep.mubr.bf16.mxu0 0
  %513 = vmatmul.mubr.bf16.gmra.mxu0 %v478
  %v514 = vpop.f32.mrf.mxu0
  %v515 = vadd.f32 0.0, %v514
  %v516 = vpop.f32.mrf.mxu0
  %v517 = vadd.f32 0.0, %v516
  %v518 = vpop.f32.mrf.mxu0
  %v519 = vpop.f32.mrf.mxu0
  %520 = vdwg.mxu0
  %v521 = vadd.f32 %v471, %v515
  %v522 = vadd.f32 %v472, %v517
  %v523 = vxor.u32 %v521, 2147483648
  %v524 = vmul.f32 %v523, 1.442695
  %v525 = vpow.pop %v524
  %v526 = vadd.f32 %v525, 1.0
  %v527 = vrcp.pop %v526
  %v528 = vmul.f32 1.0, %v527
  %v529 = vtanh.pop %v522
  %v530 = vxor.u32 %v522, 2147483648
  %v531 = vmul.f32 %v530, 1.442695
  %v532 = vpow.pop %v531
  %v533 = vadd.f32 %v532, 1.0
  %v534 = vrcp.pop %v533
  %v535 = vmul.f32 1.0, %v534
  %v536 = vmul.f32 %v528, %v461
  %v537 = vmul.f32 %v528, %v529
  %539 = vrot.lane.b32.xlu0 %v537, 64
  %v540 = vpop.permute.xlu0 %539
  %v542 = vadd.f32 %v536, %v540
  %v543 = vtanh.pop %v542
  %v544 = vmul.f32 %v535, %v543
  %546 = vrot.lane.b32.xlu0 %v544, 64
  %v547 = vpop.permute.xlu0 %546
  %549 = vst.msk [vmem:[%s304] sm:$0xff] %vm135, %v547
  %550 = vst.msk [vmem:[%s302] sm:$0xff] %vm138, %v547
  %s551 = scalar_lea.vmem %s0, 96
  %v552 = vld [vmem:[%s551] sm:$0xff]
  %v553 = vld [vmem:[%s551 + $0x8] sm:$0xff]
  %v554 = vpack.c.bf16 %v544, %v544
  %556 = vrot.lane.b32.xlu0 %v554, 64
  %v557 = vpop.permute.xlu0 %556
  %v559 = vsel %vm62, %v557, 0
  %561 = vmatprep.subr.bf16.mxu0 0
  %562 = vmatpush1.bf16.msra.mxu0 0
  %563 = vmatprep.subr.bf16.mxu0 0
  %564 = vmatpush1.bf16.msra.mxu0 0
  %565 = vmatprep.subr.bf16.mxu0 0
  %566 = vmatpush1.bf16.msra.mxu0 0
  %567 = vmatprep.subr.bf16.mxu0 0
  %568 = vmatpush1.bf16.msra.mxu0 0
  %569 = vmatprep.subr.bf16.mxu0 %v53
  %570 = vmatpush1.bf16.msra.mxu0 %v52
  %571 = vmatprep.subr.bf16.mxu0 %v51
  %572 = vmatpush1.bf16.msra.mxu0 %v50
  %573 = vmatprep.subr.bf16.mxu0 %v49
  %574 = vmatpush1.bf16.msra.mxu0 %v48
  %575 = vmatprep.subr.bf16.mxu0 %v47
  %576 = vmatpush1.bf16.msra.mxu0 %v46
  %577 = vmatprep.subr.bf16.mxu0 0
  %578 = vmatpush2.bf16.msra.mxu0 0
  %579 = vmatprep.subr.bf16.mxu0 0
  %580 = vmatpush2.bf16.msra.mxu0 0
  %581 = vmatprep.subr.bf16.mxu0 0
  %582 = vmatpush2.bf16.msra.mxu0 0
  %583 = vmatprep.subr.bf16.mxu0 0
  %584 = vmatpush2.bf16.msra.mxu0 0
  %585 = vmatprep.subr.bf16.mxu0 0
  %586 = vmatpush2.bf16.msra.mxu0 0
  %587 = vmatprep.subr.bf16.mxu0 0
  %588 = vmatpush2.bf16.msra.mxu0 0
  %589 = vmatprep.subr.bf16.mxu0 0
  %590 = vmatpush2.bf16.msra.mxu0 0
  %591 = vmatprep.subr.bf16.mxu0 0
  %592 = vmatpush2.bf16.msra.mxu0 0
  %593 = vmatprep.mubr.bf16.mxu0 0
  %594 = vmatmul.mubr.bf16.gmra.mxu0 %v559
  %v595 = vpop.f32.mrf.mxu0
  %v596 = vadd.f32 0.0, %v595
  %v597 = vpop.f32.mrf.mxu0
  %v598 = vadd.f32 0.0, %v597
  %v599 = vpop.f32.mrf.mxu0
  %v600 = vpop.f32.mrf.mxu0
  %601 = vdwg.mxu0
  %v602 = vadd.f32 %v552, %v596
  %v603 = vadd.f32 %v553, %v598
  %v604 = vxor.u32 %v602, 2147483648
  %v605 = vmul.f32 %v604, 1.442695
  %v606 = vpow.pop %v605
  %v607 = vadd.f32 %v606, 1.0
  %v608 = vrcp.pop %v607
  %v609 = vmul.f32 1.0, %v608
  %v610 = vtanh.pop %v603
  %v611 = vxor.u32 %v603, 2147483648
  %v612 = vmul.f32 %v611, 1.442695
  %v613 = vpow.pop %v612
  %v614 = vadd.f32 %v613, 1.0
  %v615 = vrcp.pop %v614
  %v616 = vmul.f32 1.0, %v615
  %v617 = vmul.f32 %v609, %v542
  %v618 = vmul.f32 %v609, %v610
  %620 = vrot.lane.b32.xlu0 %v618, 64
  %v621 = vpop.permute.xlu0 %620
  %v623 = vadd.f32 %v617, %v621
  %v624 = vtanh.pop %v623
  %v625 = vmul.f32 %v616, %v624
  %627 = vrot.lane.b32.xlu0 %v625, 64
  %v628 = vpop.permute.xlu0 %627
  %630 = vst.msk [vmem:[%s221] sm:$0xff] %vm135, %v628
  %631 = vst.msk [vmem:[%s219] sm:$0xff] %vm138, %v628
  %s632 = scalar_lea.vmem %s0, 112
  %v633 = vld [vmem:[%s632] sm:$0xff]
  %v634 = vld [vmem:[%s632 + $0x8] sm:$0xff]
  %v635 = vpack.c.bf16 %v625, %v625
  %637 = vrot.lane.b32.xlu0 %v635, 64
  %v638 = vpop.permute.xlu0 %637
  %v640 = vsel %vm62, %v638, 0
  %642 = vmatprep.subr.bf16.mxu0 0
  %643 = vmatpush1.bf16.msra.mxu0 0
  %644 = vmatprep.subr.bf16.mxu0 0
  %645 = vmatpush1.bf16.msra.mxu0 0
  %646 = vmatprep.subr.bf16.mxu0 0
  %647 = vmatpush1.bf16.msra.mxu0 0
  %648 = vmatprep.subr.bf16.mxu0 0
  %649 = vmatpush1.bf16.msra.mxu0 0
  %650 = vmatprep.subr.bf16.mxu0 %v53
  %651 = vmatpush1.bf16.msra.mxu0 %v52
  %652 = vmatprep.subr.bf16.mxu0 %v51
  %653 = vmatpush1.bf16.msra.mxu0 %v50
  %654 = vmatprep.subr.bf16.mxu0 %v49
  %655 = vmatpush1.bf16.msra.mxu0 %v48
  %656 = vmatprep.subr.bf16.mxu0 %v47
  %657 = vmatpush1.bf16.msra.mxu0 %v46
  %658 = vmatprep.subr.bf16.mxu0 0
  %659 = vmatpush2.bf16.msra.mxu0 0
  %660 = vmatprep.subr.bf16.mxu0 0
  %661 = vmatpush2.bf16.msra.mxu0 0
  %662 = vmatprep.subr.bf16.mxu0 0
  %663 = vmatpush2.bf16.msra.mxu0 0
  %664 = vmatprep.subr.bf16.mxu0 0
  %665 = vmatpush2.bf16.msra.mxu0 0
  %666 = vmatprep.subr.bf16.mxu0 0
  %667 = vmatpush2.bf16.msra.mxu0 0
  %668 = vmatprep.subr.bf16.mxu0 0
  %669 = vmatpush2.bf16.msra.mxu0 0
  %670 = vmatprep.subr.bf16.mxu0 0
  %671 = vmatpush2.bf16.msra.mxu0 0
  %672 = vmatprep.subr.bf16.mxu0 0
  %673 = vmatpush2.bf16.msra.mxu0 0
  %674 = vmatprep.mubr.bf16.mxu0 0
  %675 = vmatmul.mubr.bf16.gmra.mxu0 %v640
  %v676 = vpop.f32.mrf.mxu0
  %v677 = vadd.f32 0.0, %v676
  %v678 = vpop.f32.mrf.mxu0
  %v679 = vadd.f32 0.0, %v678
  %v680 = vpop.f32.mrf.mxu0
  %v681 = vpop.f32.mrf.mxu0
  %682 = vdwg.mxu0
  %v683 = vadd.f32 %v633, %v677
  %v684 = vadd.f32 %v634, %v679
  %v685 = vxor.u32 %v683, 2147483648
  %v686 = vmul.f32 %v685, 1.442695
  %v687 = vpow.pop %v686
  %v688 = vadd.f32 %v687, 1.0
  %v689 = vrcp.pop %v688
  %v690 = vmul.f32 1.0, %v689
  %v691 = vtanh.pop %v684
  %v692 = vxor.u32 %v684, 2147483648
  %v693 = vmul.f32 %v692, 1.442695
  %v694 = vpow.pop %v693
  %v695 = vadd.f32 %v694, 1.0
  %v696 = vrcp.pop %v695
  %v697 = vmul.f32 1.0, %v696
  %v698 = vmul.f32 %v690, %v623
  %v699 = vmul.f32 %v690, %v691
  %701 = vrot.lane.b32.xlu0 %v699, 64
  %v702 = vpop.permute.xlu0 %701
  %v704 = vadd.f32 %v698, %v702
  %v705 = vtanh.pop %v704
  %v706 = vmul.f32 %v697, %v705
  %708 = vrot.lane.b32.xlu0 %v706, 64
  %v709 = vpop.permute.xlu0 %708
  %711 = vst.msk [vmem:[%s137] sm:$0xff] %vm135, %v709
  %712 = vst.msk [vmem:[%s2] sm:$0xff] %vm138, %v709
  // Predicated region
  $region10: #{forward.2} parent=0 // pred_check
    _
  $region11: #{forward.2} parent=0 // pred_check_branch
    %714 = sbr.rel (0) target = $region13
  $region12: #{forward.2} parent=0 // pred_region
    _
  $region13: #{forward.2} parent=0 // pred_fallthru
    _
  // Predicated region
  $region14: #{forward.2} parent=0 // pred_check
    _
  $region15: #{forward.2} parent=0 // pred_check_branch
    %716 = sbr.rel (0) target = $region17
  $region16: #{forward.2} parent=0 // pred_region
    _
  $region17: #{forward.2} parent=0 // pred_fallthru
    _

</llo_original>
